<compile_context>
chip_gen: v5e
topology: v5e:2x2
jax: 0.10.0
libtpu: 0.0.40
codegen_flags: <defaults>
</compile_context>

<pallas_src>
import functools
import math

import jax
import jax.numpy as jnp
from jax.experimental import pallas as pl
from jax.experimental.pallas import tpu as pltpu


def nps_kernel(colors_ref, patch_ref, out_ref, acc_ref, *,
               n_colors, n_valid_pixels, tile_pixels, inv_numel, need_mask):
    # colors_ref: (3*N,)            f32 SMEM  -- printable colors (eps folded in: c - 1e-6)
    # patch_ref : (3, tile_rows, 128) f32 VMEM -- one sublane/lane-dense pixel tile
    # out_ref   : (1, 1)            f32 SMEM  -- scalar NPS score
    # acc_ref   : (1,)              f32 SMEM scratch -- running sum across grid steps
    step = pl.program_id(0)

    @pl.when(step == 0)
    def _():
        acc_ref[0] = jnp.float32(0.0)

    pr = patch_ref[0]                       # (tile_rows, 128)
    pg = patch_ref[1]
    pb = patch_ref[2]

    # Running min of the squared distance over the real colors (VPU only; all
    # intermediates vreg-resident).
    min_d2 = None
    for n in range(n_colors):               # static unroll, N known at trace time
        cr = colors_ref[3 * n + 0]
        cg = colors_ref[3 * n + 1]
        cb = colors_ref[3 * n + 2]
        dr = pr - cr
        dg = pg - cg
        db = pb - cb
        d2 = dr * dr + dg * dg + db * db
        min_d2 = d2 if min_d2 is None else jnp.minimum(min_d2, d2)

    # min(sqrt(x_n + eps)) == sqrt(min(x_n) + eps): single sqrt per pixel (EUP).
    d = jnp.sqrt(min_d2 + jnp.float32(1e-6))

    if need_mask:                            # static: only when S was padded
        tile_rows = pr.shape[0]
        row_ids = jax.lax.broadcasted_iota(jnp.int32, (tile_rows, 128), 0)
        lane_ids = jax.lax.broadcasted_iota(jnp.int32, (tile_rows, 128), 1)
        pix = step * tile_pixels + row_ids * 128 + lane_ids
        d = jnp.where(pix < n_valid_pixels, d, jnp.float32(0.0))

    acc_ref[0] += jnp.sum(d)

    @pl.when(step == pl.num_programs(0) - 1)
    def _():
        out_ref[0, 0] = acc_ref[0] * jnp.float32(inv_numel)


def nps_score(adv_patch, printable_colors):
    """adv_patch: (3, side, side) f32; printable_colors: (N, 3) f32 -> scalar f32.

    The torch module's (N, 3, side, side) parameter is each printable color broadcast
    over the patch, so only the (N, 3) color table is needed.
    """
    C, H, W = adv_patch.shape
    assert C == 3
    N = printable_colors.shape[0]
    S = H * W

    # Sublane/lane-dense pixel packing: (3, total_rows, 128), total_rows % tile_rows == 0.
    MAX_TILE_ROWS = 256                                  # 32K pixels / 384 KiB per buffer
    rows_needed = -(-S // 128)
    tile_rows = min(MAX_TILE_ROWS, ((rows_needed + 7) // 8) * 8)
    total_rows = ((rows_needed + tile_rows - 1) // tile_rows) * tile_rows
    num_tiles = total_rows // tile_rows
    S_pad = total_rows * 128

    flat = adv_patch.reshape(3, S).astype(jnp.float32)
    if S_pad != S:
        flat = jnp.pad(flat, ((0, 0), (0, S_pad - S)))
    patch = flat.reshape(3, total_rows, 128)

    # Color scalars for SMEM, eps folded in (p - c + 1e-6 == p - (c - 1e-6) up to 1 ulp).
    colors = (printable_colors.astype(jnp.float32) - jnp.float32(1e-6)).reshape(3 * N)

    kernel = functools.partial(
        nps_kernel,
        n_colors=N,
        n_valid_pixels=S,
        tile_pixels=tile_rows * 128,
        inv_numel=1.0 / (3.0 * S),
        need_mask=(S_pad != S),
    )

    out = pl.pallas_call(
        kernel,
        out_shape=jax.ShapeDtypeStruct((1, 1), jnp.float32),
        grid=(num_tiles,),
        in_specs=[
            pl.BlockSpec(memory_space=pltpu.MemorySpace.SMEM),            # colors
            pl.BlockSpec((3, tile_rows, 128), lambda i: (0, i, 0)),       # patch tile
        ],
        out_specs=pl.BlockSpec(memory_space=pltpu.MemorySpace.SMEM),
        scratch_shapes=[pltpu.SMEM((1,), jnp.float32)],
        compiler_params=pltpu.CompilerParams(
            dimension_semantics=("arbitrary",),
            vmem_limit_bytes=32 * 1024 * 1024,
        ),
    )(colors, patch)
    return out[0, 0]


if __name__ == "__main__":
    side = 16
    n_colors = 12

    key = jax.random.PRNGKey(0)
    k_patch, k_colors = jax.random.split(key)

    # adv_patch: (3, side, side) as in the torch module's forward.
    adv_patch = jax.random.uniform(k_patch, (3, side, side), dtype=jnp.float32)
    # Deterministic stand-in for the "printable RGB file": N RGB triplets in [0, 1].
    printable_colors = jax.random.uniform(k_colors, (n_colors, 3), dtype=jnp.float32)

    score = jax.block_until_ready(nps_score(adv_patch, printable_colors))

    # Pure-JAX reference mirroring the torch code (with the full broadcast parameter).
    pa = jnp.broadcast_to(
        printable_colors[:, :, None, None], (n_colors, 3, side, side)
    ).astype(jnp.float32)
    cd = (adv_patch[None] - pa + 1e-6) ** 2
    cd = jnp.sqrt(jnp.sum(cd, axis=1) + 1e-6)
    ref = jnp.sum(jnp.min(cd, axis=0)) / adv_patch.size

    assert jnp.allclose(score, ref, rtol=1e-5, atol=1e-6), (score, ref)
    print("KERNEL_OK")
</pallas_src>

<mosaic_0001>
module attributes {stable_mosaic.version = 11 : i64} {
  func.func @nps_kernel(%arg0: i32, %arg1: memref<36xf32, #tpu.memory_space<smem>>, %arg2: memref<3x8x128xf32, #tpu.memory_space<vmem>>, %arg3: memref<1x1xf32, #tpu.memory_space<smem>>, %arg4: memref<1xf32, #tpu.memory_space<smem>>) attributes {dimension_semantics = [#tpu.dimension_semantics<arbitrary>], iteration_bounds = array<i64: 1>, scalar_prefetch = 0 : i64, scratch_operands = 1 : i64, tpu.core_type = #tpu.core_type<tc>, window_params = [{transform_indices = @transform_0, window_bounds = array<i64: 36>}, {transform_indices = @transform_1, window_bounds = array<i64: 3, 8, 128>}, {transform_indices = @transform_2, window_bounds = array<i64: 1, 1>}]} {
    %c0_i32 = arith.constant 0 : i32
    %0 = arith.cmpi eq, %arg0, %c0_i32 : i32
    %1 = arith.extui %0 : i1 to i32
    %c0_i32_0 = arith.constant 0 : i32
    %2 = arith.cmpi ne, %1, %c0_i32_0 : i32
    scf.if %2 {
      %cst_16 = arith.constant 0.000000e+00 : f32
      %c0_17 = arith.constant 0 : index
      %213 = memref.load %arg4[%c0_17] : memref<1xf32, #tpu.memory_space<smem>>
      memref.store %cst_16, %arg4[%c0_17] : memref<1xf32, #tpu.memory_space<smem>>
    } else {
    }
    %c0 = arith.constant 0 : index
    %c0_1 = arith.constant 0 : index
    %c0_2 = arith.constant 0 : index
    %3 = vector.load %arg2[%c0, %c0_1, %c0_2] : memref<3x8x128xf32, #tpu.memory_space<vmem>>, vector<1x8x128xf32>
    %4 = vector.shape_cast %3 : vector<1x8x128xf32> to vector<8x128xf32>
    %c1 = arith.constant 1 : index
    %c0_3 = arith.constant 0 : index
    %c0_4 = arith.constant 0 : index
    %5 = vector.load %arg2[%c1, %c0_3, %c0_4] : memref<3x8x128xf32, #tpu.memory_space<vmem>>, vector<1x8x128xf32>
    %6 = vector.shape_cast %5 : vector<1x8x128xf32> to vector<8x128xf32>
    %c2 = arith.constant 2 : index
    %c0_5 = arith.constant 0 : index
    %c0_6 = arith.constant 0 : index
    %7 = vector.load %arg2[%c2, %c0_5, %c0_6] : memref<3x8x128xf32, #tpu.memory_space<vmem>>, vector<1x8x128xf32>
    %8 = vector.shape_cast %7 : vector<1x8x128xf32> to vector<8x128xf32>
    %c0_7 = arith.constant 0 : index
    %9 = memref.load %arg1[%c0_7] : memref<36xf32, #tpu.memory_space<smem>>
    %c1_8 = arith.constant 1 : index
    %10 = memref.load %arg1[%c1_8] : memref<36xf32, #tpu.memory_space<smem>>
    %c2_9 = arith.constant 2 : index
    %11 = memref.load %arg1[%c2_9] : memref<36xf32, #tpu.memory_space<smem>>
    %12 = vector.broadcast %9 : f32 to vector<8x128xf32>
    %13 = arith.subf %4, %12 : vector<8x128xf32>
    %14 = vector.broadcast %10 : f32 to vector<8x128xf32>
    %15 = arith.subf %6, %14 : vector<8x128xf32>
    %16 = vector.broadcast %11 : f32 to vector<8x128xf32>
    %17 = arith.subf %8, %16 : vector<8x128xf32>
    %18 = arith.mulf %13, %13 : vector<8x128xf32>
    %19 = arith.mulf %15, %15 : vector<8x128xf32>
    %20 = arith.addf %18, %19 : vector<8x128xf32>
    %21 = arith.mulf %17, %17 : vector<8x128xf32>
    %22 = arith.addf %20, %21 : vector<8x128xf32>
    %c3 = arith.constant 3 : index
    %23 = memref.load %arg1[%c3] : memref<36xf32, #tpu.memory_space<smem>>
    %c4 = arith.constant 4 : index
    %24 = memref.load %arg1[%c4] : memref<36xf32, #tpu.memory_space<smem>>
    %c5 = arith.constant 5 : index
    %25 = memref.load %arg1[%c5] : memref<36xf32, #tpu.memory_space<smem>>
    %26 = vector.broadcast %23 : f32 to vector<8x128xf32>
    %27 = arith.subf %4, %26 : vector<8x128xf32>
    %28 = vector.broadcast %24 : f32 to vector<8x128xf32>
    %29 = arith.subf %6, %28 : vector<8x128xf32>
    %30 = vector.broadcast %25 : f32 to vector<8x128xf32>
    %31 = arith.subf %8, %30 : vector<8x128xf32>
    %32 = arith.mulf %27, %27 : vector<8x128xf32>
    %33 = arith.mulf %29, %29 : vector<8x128xf32>
    %34 = arith.addf %32, %33 : vector<8x128xf32>
    %35 = arith.mulf %31, %31 : vector<8x128xf32>
    %36 = arith.addf %34, %35 : vector<8x128xf32>
    %37 = arith.minimumf %22, %36 : vector<8x128xf32>
    %c6 = arith.constant 6 : index
    %38 = memref.load %arg1[%c6] : memref<36xf32, #tpu.memory_space<smem>>
    %c7 = arith.constant 7 : index
    %39 = memref.load %arg1[%c7] : memref<36xf32, #tpu.memory_space<smem>>
    %c8 = arith.constant 8 : index
    %40 = memref.load %arg1[%c8] : memref<36xf32, #tpu.memory_space<smem>>
    %41 = vector.broadcast %38 : f32 to vector<8x128xf32>
    %42 = arith.subf %4, %41 : vector<8x128xf32>
    %43 = vector.broadcast %39 : f32 to vector<8x128xf32>
    %44 = arith.subf %6, %43 : vector<8x128xf32>
    %45 = vector.broadcast %40 : f32 to vector<8x128xf32>
    %46 = arith.subf %8, %45 : vector<8x128xf32>
    %47 = arith.mulf %42, %42 : vector<8x128xf32>
    %48 = arith.mulf %44, %44 : vector<8x128xf32>
    %49 = arith.addf %47, %48 : vector<8x128xf32>
    %50 = arith.mulf %46, %46 : vector<8x128xf32>
    %51 = arith.addf %49, %50 : vector<8x128xf32>
    %52 = arith.minimumf %37, %51 : vector<8x128xf32>
    %c9 = arith.constant 9 : index
    %53 = memref.load %arg1[%c9] : memref<36xf32, #tpu.memory_space<smem>>
    %c10 = arith.constant 10 : index
    %54 = memref.load %arg1[%c10] : memref<36xf32, #tpu.memory_space<smem>>
    %c11 = arith.constant 11 : index
    %55 = memref.load %arg1[%c11] : memref<36xf32, #tpu.memory_space<smem>>
    %56 = vector.broadcast %53 : f32 to vector<8x128xf32>
    %57 = arith.subf %4, %56 : vector<8x128xf32>
    %58 = vector.broadcast %54 : f32 to vector<8x128xf32>
    %59 = arith.subf %6, %58 : vector<8x128xf32>
    %60 = vector.broadcast %55 : f32 to vector<8x128xf32>
    %61 = arith.subf %8, %60 : vector<8x128xf32>
    %62 = arith.mulf %57, %57 : vector<8x128xf32>
    %63 = arith.mulf %59, %59 : vector<8x128xf32>
    %64 = arith.addf %62, %63 : vector<8x128xf32>
    %65 = arith.mulf %61, %61 : vector<8x128xf32>
    %66 = arith.addf %64, %65 : vector<8x128xf32>
    %67 = arith.minimumf %52, %66 : vector<8x128xf32>
    %c12 = arith.constant 12 : index
    %68 = memref.load %arg1[%c12] : memref<36xf32, #tpu.memory_space<smem>>
    %c13 = arith.constant 13 : index
    %69 = memref.load %arg1[%c13] : memref<36xf32, #tpu.memory_space<smem>>
    %c14 = arith.constant 14 : index
    %70 = memref.load %arg1[%c14] : memref<36xf32, #tpu.memory_space<smem>>
    %71 = vector.broadcast %68 : f32 to vector<8x128xf32>
    %72 = arith.subf %4, %71 : vector<8x128xf32>
    %73 = vector.broadcast %69 : f32 to vector<8x128xf32>
    %74 = arith.subf %6, %73 : vector<8x128xf32>
    %75 = vector.broadcast %70 : f32 to vector<8x128xf32>
    %76 = arith.subf %8, %75 : vector<8x128xf32>
    %77 = arith.mulf %72, %72 : vector<8x128xf32>
    %78 = arith.mulf %74, %74 : vector<8x128xf32>
    %79 = arith.addf %77, %78 : vector<8x128xf32>
    %80 = arith.mulf %76, %76 : vector<8x128xf32>
    %81 = arith.addf %79, %80 : vector<8x128xf32>
    %82 = arith.minimumf %67, %81 : vector<8x128xf32>
    %c15 = arith.constant 15 : index
    %83 = memref.load %arg1[%c15] : memref<36xf32, #tpu.memory_space<smem>>
    %c16 = arith.constant 16 : index
    %84 = memref.load %arg1[%c16] : memref<36xf32, #tpu.memory_space<smem>>
    %c17 = arith.constant 17 : index
    %85 = memref.load %arg1[%c17] : memref<36xf32, #tpu.memory_space<smem>>
    %86 = vector.broadcast %83 : f32 to vector<8x128xf32>
    %87 = arith.subf %4, %86 : vector<8x128xf32>
    %88 = vector.broadcast %84 : f32 to vector<8x128xf32>
    %89 = arith.subf %6, %88 : vector<8x128xf32>
    %90 = vector.broadcast %85 : f32 to vector<8x128xf32>
    %91 = arith.subf %8, %90 : vector<8x128xf32>
    %92 = arith.mulf %87, %87 : vector<8x128xf32>
    %93 = arith.mulf %89, %89 : vector<8x128xf32>
    %94 = arith.addf %92, %93 : vector<8x128xf32>
    %95 = arith.mulf %91, %91 : vector<8x128xf32>
    %96 = arith.addf %94, %95 : vector<8x128xf32>
    %97 = arith.minimumf %82, %96 : vector<8x128xf32>
    %c18 = arith.constant 18 : index
    %98 = memref.load %arg1[%c18] : memref<36xf32, #tpu.memory_space<smem>>
    %c19 = arith.constant 19 : index
    %99 = memref.load %arg1[%c19] : memref<36xf32, #tpu.memory_space<smem>>
    %c20 = arith.constant 20 : index
    %100 = memref.load %arg1[%c20] : memref<36xf32, #tpu.memory_space<smem>>
    %101 = vector.broadcast %98 : f32 to vector<8x128xf32>
    %102 = arith.subf %4, %101 : vector<8x128xf32>
    %103 = vector.broadcast %99 : f32 to vector<8x128xf32>
    %104 = arith.subf %6, %103 : vector<8x128xf32>
    %105 = vector.broadcast %100 : f32 to vector<8x128xf32>
    %106 = arith.subf %8, %105 : vector<8x128xf32>
    %107 = arith.mulf %102, %102 : vector<8x128xf32>
    %108 = arith.mulf %104, %104 : vector<8x128xf32>
    %109 = arith.addf %107, %108 : vector<8x128xf32>
    %110 = arith.mulf %106, %106 : vector<8x128xf32>
    %111 = arith.addf %109, %110 : vector<8x128xf32>
    %112 = arith.minimumf %97, %111 : vector<8x128xf32>
    %c21 = arith.constant 21 : index
    %113 = memref.load %arg1[%c21] : memref<36xf32, #tpu.memory_space<smem>>
    %c22 = arith.constant 22 : index
    %114 = memref.load %arg1[%c22] : memref<36xf32, #tpu.memory_space<smem>>
    %c23 = arith.constant 23 : index
    %115 = memref.load %arg1[%c23] : memref<36xf32, #tpu.memory_space<smem>>
    %116 = vector.broadcast %113 : f32 to vector<8x128xf32>
    %117 = arith.subf %4, %116 : vector<8x128xf32>
    %118 = vector.broadcast %114 : f32 to vector<8x128xf32>
    %119 = arith.subf %6, %118 : vector<8x128xf32>
    %120 = vector.broadcast %115 : f32 to vector<8x128xf32>
    %121 = arith.subf %8, %120 : vector<8x128xf32>
    %122 = arith.mulf %117, %117 : vector<8x128xf32>
    %123 = arith.mulf %119, %119 : vector<8x128xf32>
    %124 = arith.addf %122, %123 : vector<8x128xf32>
    %125 = arith.mulf %121, %121 : vector<8x128xf32>
    %126 = arith.addf %124, %125 : vector<8x128xf32>
    %127 = arith.minimumf %112, %126 : vector<8x128xf32>
    %c24 = arith.constant 24 : index
    %128 = memref.load %arg1[%c24] : memref<36xf32, #tpu.memory_space<smem>>
    %c25 = arith.constant 25 : index
    %129 = memref.load %arg1[%c25] : memref<36xf32, #tpu.memory_space<smem>>
    %c26 = arith.constant 26 : index
    %130 = memref.load %arg1[%c26] : memref<36xf32, #tpu.memory_space<smem>>
    %131 = vector.broadcast %128 : f32 to vector<8x128xf32>
    %132 = arith.subf %4, %131 : vector<8x128xf32>
    %133 = vector.broadcast %129 : f32 to vector<8x128xf32>
    %134 = arith.subf %6, %133 : vector<8x128xf32>
    %135 = vector.broadcast %130 : f32 to vector<8x128xf32>
    %136 = arith.subf %8, %135 : vector<8x128xf32>
    %137 = arith.mulf %132, %132 : vector<8x128xf32>
    %138 = arith.mulf %134, %134 : vector<8x128xf32>
    %139 = arith.addf %137, %138 : vector<8x128xf32>
    %140 = arith.mulf %136, %136 : vector<8x128xf32>
    %141 = arith.addf %139, %140 : vector<8x128xf32>
    %142 = arith.minimumf %127, %141 : vector<8x128xf32>
    %c27 = arith.constant 27 : index
    %143 = memref.load %arg1[%c27] : memref<36xf32, #tpu.memory_space<smem>>
    %c28 = arith.constant 28 : index
    %144 = memref.load %arg1[%c28] : memref<36xf32, #tpu.memory_space<smem>>
    %c29 = arith.constant 29 : index
    %145 = memref.load %arg1[%c29] : memref<36xf32, #tpu.memory_space<smem>>
    %146 = vector.broadcast %143 : f32 to vector<8x128xf32>
    %147 = arith.subf %4, %146 : vector<8x128xf32>
    %148 = vector.broadcast %144 : f32 to vector<8x128xf32>
    %149 = arith.subf %6, %148 : vector<8x128xf32>
    %150 = vector.broadcast %145 : f32 to vector<8x128xf32>
    %151 = arith.subf %8, %150 : vector<8x128xf32>
    %152 = arith.mulf %147, %147 : vector<8x128xf32>
    %153 = arith.mulf %149, %149 : vector<8x128xf32>
    %154 = arith.addf %152, %153 : vector<8x128xf32>
    %155 = arith.mulf %151, %151 : vector<8x128xf32>
    %156 = arith.addf %154, %155 : vector<8x128xf32>
    %157 = arith.minimumf %142, %156 : vector<8x128xf32>
    %c30 = arith.constant 30 : index
    %158 = memref.load %arg1[%c30] : memref<36xf32, #tpu.memory_space<smem>>
    %c31 = arith.constant 31 : index
    %159 = memref.load %arg1[%c31] : memref<36xf32, #tpu.memory_space<smem>>
    %c32 = arith.constant 32 : index
    %160 = memref.load %arg1[%c32] : memref<36xf32, #tpu.memory_space<smem>>
    %161 = vector.broadcast %158 : f32 to vector<8x128xf32>
    %162 = arith.subf %4, %161 : vector<8x128xf32>
    %163 = vector.broadcast %159 : f32 to vector<8x128xf32>
    %164 = arith.subf %6, %163 : vector<8x128xf32>
    %165 = vector.broadcast %160 : f32 to vector<8x128xf32>
    %166 = arith.subf %8, %165 : vector<8x128xf32>
    %167 = arith.mulf %162, %162 : vector<8x128xf32>
    %168 = arith.mulf %164, %164 : vector<8x128xf32>
    %169 = arith.addf %167, %168 : vector<8x128xf32>
    %170 = arith.mulf %166, %166 : vector<8x128xf32>
    %171 = arith.addf %169, %170 : vector<8x128xf32>
    %172 = arith.minimumf %157, %171 : vector<8x128xf32>
    %c33 = arith.constant 33 : index
    %173 = memref.load %arg1[%c33] : memref<36xf32, #tpu.memory_space<smem>>
    %c34 = arith.constant 34 : index
    %174 = memref.load %arg1[%c34] : memref<36xf32, #tpu.memory_space<smem>>
    %c35 = arith.constant 35 : index
    %175 = memref.load %arg1[%c35] : memref<36xf32, #tpu.memory_space<smem>>
    %176 = vector.broadcast %173 : f32 to vector<8x128xf32>
    %177 = arith.subf %4, %176 : vector<8x128xf32>
    %178 = vector.broadcast %174 : f32 to vector<8x128xf32>
    %179 = arith.subf %6, %178 : vector<8x128xf32>
    %180 = vector.broadcast %175 : f32 to vector<8x128xf32>
    %181 = arith.subf %8, %180 : vector<8x128xf32>
    %182 = arith.mulf %177, %177 : vector<8x128xf32>
    %183 = arith.mulf %179, %179 : vector<8x128xf32>
    %184 = arith.addf %182, %183 : vector<8x128xf32>
    %185 = arith.mulf %181, %181 : vector<8x128xf32>
    %186 = arith.addf %184, %185 : vector<8x128xf32>
    %187 = arith.minimumf %172, %186 : vector<8x128xf32>
    %cst = arith.constant 9.99999997E-7 : f32
    %188 = vector.broadcast %cst : f32 to vector<8x128xf32>
    %189 = arith.addf %187, %188 : vector<8x128xf32>
    %190 = math.sqrt %189 : vector<8x128xf32>
    %191 = tpu.iota {dimensions = array<i32: 0>} : vector<8x128xi32>
    %192 = tpu.iota {dimensions = array<i32: 1>} : vector<8x128xi32>
    %c1024_i32 = arith.constant 1024 : i32
    %193 = arith.muli %arg0, %c1024_i32 : i32
    %c128_i32 = arith.constant 128 : i32
    %194 = vector.broadcast %c128_i32 : i32 to vector<8x128xi32>
    %195 = arith.muli %191, %194 : vector<8x128xi32>
    %196 = vector.broadcast %193 : i32 to vector<8x128xi32>
    %197 = arith.addi %196, %195 : vector<8x128xi32>
    %198 = arith.addi %197, %192 : vector<8x128xi32>
    %c256_i32 = arith.constant 256 : i32
    %199 = vector.broadcast %c256_i32 : i32 to vector<8x128xi32>
    %200 = arith.cmpi slt, %198, %199 : vector<8x128xi32>
    %cst_10 = arith.constant 0.000000e+00 : f32
    %201 = vector.broadcast %cst_10 : f32 to vector<8x128xf32>
    %202 = arith.select %200, %190, %201 : vector<8x128xi1>, vector<8x128xf32>
    %c0_11 = arith.constant 0 : index
    %203 = memref.load %arg4[%c0_11] : memref<1xf32, #tpu.memory_space<smem>>
    %204 = vector.shape_cast %202 : vector<8x128xf32> to vector<1x8x128xf32>
    %cst_12 = arith.constant dense<0.000000e+00> : vector<1xf32>
    %205 = vector.multi_reduction <add>, %204, %cst_12 [1, 2] : vector<1x8x128xf32> to vector<1xf32>
    %206 = vector.shape_cast %205 : vector<1xf32> to vector<1x1x1xf32>
    %207 = vector.extract %206[0, 0, 0] : f32 from vector<1x1x1xf32>
    %208 = arith.addf %203, %207 : f32
    %c0_13 = arith.constant 0 : index
    %209 = memref.load %arg4[%c0_13] : memref<1xf32, #tpu.memory_space<smem>>
    memref.store %208, %arg4[%c0_13] : memref<1xf32, #tpu.memory_space<smem>>
    %c0_i32_14 = arith.constant 0 : i32
    %210 = arith.cmpi eq, %arg0, %c0_i32_14 : i32
    %211 = arith.extui %210 : i1 to i32
    %c0_i32_15 = arith.constant 0 : i32
    %212 = arith.cmpi ne, %211, %c0_i32_15 : i32
    scf.if %212 {
      %c0_16 = arith.constant 0 : index
      %213 = memref.load %arg4[%c0_16] : memref<1xf32, #tpu.memory_space<smem>>
      %cst_17 = arith.constant 0.00130208337 : f32
      %214 = arith.mulf %213, %cst_17 : f32
      %c0_18 = arith.constant 0 : index
      %c0_19 = arith.constant 0 : index
      %215 = memref.load %arg3[%c0_18, %c0_19] : memref<1x1xf32, #tpu.memory_space<smem>>
      memref.store %214, %arg3[%c0_18, %c0_19] : memref<1x1xf32, #tpu.memory_space<smem>>
    } else {
    }
    return
  }
  func.func @transform_0(%arg0: i32) -> i32 {
    %c0_i32 = arith.constant 0 : i32
    %c0_i32_0 = arith.constant 0 : i32
    return %c0_i32 : i32
  }
  func.func @transform_1(%arg0: i32) -> (i32, i32, i32) {
    %c0_i32 = arith.constant 0 : i32
    %c0_i32_0 = arith.constant 0 : i32
    %c0_i32_1 = arith.constant 0 : i32
    return %c0_i32, %arg0, %c0_i32_0 : i32, i32, i32
  }
  func.func @transform_2(%arg0: i32) -> (i32, i32) {
    %c0_i32 = arith.constant 0 : i32
    %c0_i32_0 = arith.constant 0 : i32
    %c0_i32_1 = arith.constant 0 : i32
    return %c0_i32, %c0_i32_0 : i32, i32
  }
}

</mosaic_0001>

<llo_original>
// kernel: tpu_custom_call.1
$region0: #{tpu_custom_call.1}
  #allocation0 [shape = 'u32[]', space=smem, size = 0x4, offset = 0x4, fixed_abs, tag = 'smem constant byte address 0x4 - core index']
  #allocation1 [shape = 'u32[72,128]{1,0:T(1,128)}', space=vmem, size = 0x9000, scoped, tag = 'internal scratch']
  #allocation2 [shape = 'f32[1]{0:T(128)}', space=smem, size = 0x200, scoped, tag = 'scratch operand']
  %s0 = inlined_call_operand.hbm [shape: f32[36], index: 0, kind: input, shape index: {}]
  %s1 = inlined_call_operand.hbm [shape: f32[3,8,128], index: 1, kind: input, shape index: {}]
  %s2 = inlined_call_operand.hbm [shape: f32[1,1], index: 2, kind: output, shape index: {}]
  %s3 = sld [smem:[#allocation0]]
  $region34: #{tpu_custom_call.1} parent=0
    _
  %s5 = ssub.s32 1, %s3
  %s6 = scalar_select 0, %s5, %s3
  $region1: #{tpu_custom_call.1} parent=0
    #allocation3 [shape = 'u8[512]{0}', space=smem, size = 0x200, scoped, tag = 'input window, operand 0, single buffered']
    #allocation4 [shape = 's32[1]{0}', space=sflag, size = 0x4, scoped, tag = 'scoped memory for tpu_custom_call.1']
    #allocation5 [shape = 's32[1]{0}', space=sflag, size = 0x4, scoped, tag = 'scoped memory for tpu_custom_call.1']
    #allocation6 [shape = 's32[1]{0}', space=sflag, size = 0x4, scoped, tag = 'scoped memory for tpu_custom_call.1']
    #allocation7 [shape = 'u8[12288]{0}', space=vmem, size = 0x3000, scoped, tag = 'input window, operand 1, single buffered']
    #allocation8 [shape = 'u8[512]{0}', space=smem, size = 0x200, scoped, tag = 'output window, operand 0, single buffered']
    %7 = vsyncpa [#allocation5], 0
    %8 = vsyncpa [#allocation4], 0
    %9 = vsyncpa [#allocation6], 0
    // Predicated region
    $region2: #{tpu_custom_call.1} parent=1 // pred_check
      _
    $region3: #{tpu_custom_call.1} parent=1 // pred_check_branch
      %11 = sbr.rel (0) target = $region5
    $region4: #{tpu_custom_call.1} parent=1 // pred_region
      %13 = vsyncadd [#allocation5], 0
      %s15 = sshll.u32 %s0, 4
      %s16 = int_to_ptr.hbm [resolvable:$true] %s15
      %18 = dma.hbm_to_smem %s16, 16, [#allocation3], [#allocation5]
    $region5: #{tpu_custom_call.1} parent=1 // pred_fallthru
      _
    // Predicated region
    $region6: #{tpu_custom_call.1} parent=1 // pred_check
      _
    $region7: #{tpu_custom_call.1} parent=1 // pred_check_branch
      %20 = sbr.rel (0) target = $region9
    $region8: #{tpu_custom_call.1} parent=1 // pred_region
      %22 = vsyncadd [#allocation4], 0
      %s23 = sshll.u32 %s1, 4
      %s24 = int_to_ptr.hbm [resolvable:$true] %s23
      %s25 = sshll.u32 [#allocation7], 4
      %s26 = int_to_ptr.vmem [resolvable:$true] %s25
      %31 = dma.hbm_to_vmem [thread:$0]  %s24, 384, %s26, [#allocation4], 128, 128, 8
    $region9: #{tpu_custom_call.1} parent=1 // pred_fallthru
      _
    // Predicated region
    $region10: #{tpu_custom_call.1} parent=1 // pred_check
      _
    $region11: #{tpu_custom_call.1} parent=1 // pred_check_branch
      %33 = sbr.rel (0) target = $region13
    $region12: #{tpu_custom_call.1} parent=1 // pred_region
      %35 = dma.done [#allocation5], 16
    $region13: #{tpu_custom_call.1} parent=1 // pred_fallthru
      _
    // Predicated region
    $region14: #{tpu_custom_call.1} parent=1 // pred_check
      _
    $region15: #{tpu_custom_call.1} parent=1 // pred_check_branch
      %37 = sbr.rel (0) target = $region17
    $region16: #{tpu_custom_call.1} parent=1 // pred_region
      %39 = dma.done [#allocation4], 384
    $region17: #{tpu_custom_call.1} parent=1 // pred_fallthru
      _
    %40 = sfence
    %p41 = scmp.eq.s32.totalorder 0, 0
    // Predicated region
    $region18: #{tpu_custom_call.1} parent=1 // pred_check
      %p42 = pneg %p41
    $region19: #{tpu_custom_call.1} parent=1 // pred_check_branch
      %44 = sbr.rel (%p42) target = $region21
    $region20: #{tpu_custom_call.1} parent=1 // pred_region
      %s45 = scalar_lea.smem [#allocation2], 0
      %46 = sst [smem:[%s45]] 0.0
    $region21: #{tpu_custom_call.1} parent=1 // pred_fallthru
      _
    %v47 = vld [vmem:[#allocation7] sm:$0xff]
    %s48 = scalar_lea.vmem [#allocation7], 8
    %v49 = vld [vmem:[%s48] sm:$0xff]
    %s50 = scalar_lea.vmem [#allocation7], 16
    %v51 = vld [vmem:[%s50] sm:$0xff]
    %s52 = sld [smem:[#allocation3]]
    %s53 = sld [smem:[#allocation3 + $0x1]]
    %s54 = sld [smem:[#allocation3 + $0x2]]
    %v55 = vstv %s52
    %v56 = vsub.f32 %v47, %v55
    %v57 = vstv %s53
    %v58 = vsub.f32 %v49, %v57
    %v59 = vstv %s54
    %v60 = vsub.f32 %v51, %v59
    %v61 = vmul.f32 %v56, %v56
    %v62 = vmul.f32 %v58, %v58
    %v63 = vadd.f32 %v61, %v62
    %v64 = vmul.f32 %v60, %v60
    %v65 = vadd.f32 %v63, %v64
    %s66 = sld [smem:[#allocation3 + $0x3]]
    %s67 = sld [smem:[#allocation3 + $0x4]]
    %s68 = sld [smem:[#allocation3 + $0x5]]
    %v69 = vstv %s66
    %v70 = vsub.f32 %v47, %v69
    %v71 = vstv %s67
    %v72 = vsub.f32 %v49, %v71
    %v73 = vstv %s68
    %v74 = vsub.f32 %v51, %v73
    %v75 = vmul.f32 %v70, %v70
    %v76 = vmul.f32 %v72, %v72
    %v77 = vadd.f32 %v75, %v76
    %v78 = vmul.f32 %v74, %v74
    %v79 = vadd.f32 %v77, %v78
    %v80 = vmin.f32 %v65, %v79
    %s81 = sld [smem:[#allocation3 + $0x6]]
    %s82 = sld [smem:[#allocation3 + $0x7]]
    %s83 = sld [smem:[#allocation3 + $0x8]]
    %v84 = vstv %s81
    %v85 = vsub.f32 %v47, %v84
    %v86 = vstv %s82
    %v87 = vsub.f32 %v49, %v86
    %v88 = vstv %s83
    %v89 = vsub.f32 %v51, %v88
    %v90 = vmul.f32 %v85, %v85
    %v91 = vmul.f32 %v87, %v87
    %v92 = vadd.f32 %v90, %v91
    %v93 = vmul.f32 %v89, %v89
    %v94 = vadd.f32 %v92, %v93
    %v95 = vmin.f32 %v80, %v94
    %s96 = sld [smem:[#allocation3 + $0x9]]
    %s97 = sld [smem:[#allocation3 + $0xa]]
    %s98 = sld [smem:[#allocation3 + $0xb]]
    %v99 = vstv %s96
    %v100 = vsub.f32 %v47, %v99
    %v101 = vstv %s97
    %v102 = vsub.f32 %v49, %v101
    %v103 = vstv %s98
    %v104 = vsub.f32 %v51, %v103
    %v105 = vmul.f32 %v100, %v100
    %v106 = vmul.f32 %v102, %v102
    %v107 = vadd.f32 %v105, %v106
    %v108 = vmul.f32 %v104, %v104
    %v109 = vadd.f32 %v107, %v108
    %v110 = vmin.f32 %v95, %v109
    %s111 = sld [smem:[#allocation3 + $0xc]]
    %s112 = sld [smem:[#allocation3 + $0xd]]
    %s113 = sld [smem:[#allocation3 + $0xe]]
    %v114 = vstv %s111
    %v115 = vsub.f32 %v47, %v114
    %v116 = vstv %s112
    %v117 = vsub.f32 %v49, %v116
    %v118 = vstv %s113
    %v119 = vsub.f32 %v51, %v118
    %v120 = vmul.f32 %v115, %v115
    %v121 = vmul.f32 %v117, %v117
    %v122 = vadd.f32 %v120, %v121
    %v123 = vmul.f32 %v119, %v119
    %v124 = vadd.f32 %v122, %v123
    %v125 = vmin.f32 %v110, %v124
    %s126 = sld [smem:[#allocation3 + $0xf]]
    %s127 = sld [smem:[#allocation3 + $0x10]]
    %s128 = sld [smem:[#allocation3 + $0x11]]
    %v129 = vstv %s126
    %v130 = vsub.f32 %v47, %v129
    %v131 = vstv %s127
    %v132 = vsub.f32 %v49, %v131
    %v133 = vstv %s128
    %v134 = vsub.f32 %v51, %v133
    %v135 = vmul.f32 %v130, %v130
    %v136 = vmul.f32 %v132, %v132
    %v137 = vadd.f32 %v135, %v136
    %v138 = vmul.f32 %v134, %v134
    %v139 = vadd.f32 %v137, %v138
    %v140 = vmin.f32 %v125, %v139
    %s141 = sld [smem:[#allocation3 + $0x12]]
    %s142 = sld [smem:[#allocation3 + $0x13]]
    %s143 = sld [smem:[#allocation3 + $0x14]]
    %v144 = vstv %s141
    %v145 = vsub.f32 %v47, %v144
    %v146 = vstv %s142
    %v147 = vsub.f32 %v49, %v146
    %v148 = vstv %s143
    %v149 = vsub.f32 %v51, %v148
    %v150 = vmul.f32 %v145, %v145
    %v151 = vmul.f32 %v147, %v147
    %v152 = vadd.f32 %v150, %v151
    %v153 = vmul.f32 %v149, %v149
    %v154 = vadd.f32 %v152, %v153
    %v155 = vmin.f32 %v140, %v154
    %s156 = sld [smem:[#allocation3 + $0x15]]
    %s157 = sld [smem:[#allocation3 + $0x16]]
    %s158 = sld [smem:[#allocation3 + $0x17]]
    %v159 = vstv %s156
    %v160 = vsub.f32 %v47, %v159
    %v161 = vstv %s157
    %v162 = vsub.f32 %v49, %v161
    %v163 = vstv %s158
    %v164 = vsub.f32 %v51, %v163
    %v165 = vmul.f32 %v160, %v160
    %v166 = vmul.f32 %v162, %v162
    %v167 = vadd.f32 %v165, %v166
    %v168 = vmul.f32 %v164, %v164
    %v169 = vadd.f32 %v167, %v168
    %v170 = vmin.f32 %v155, %v169
    %s171 = sld [smem:[#allocation3 + $0x18]]
    %s172 = sld [smem:[#allocation3 + $0x19]]
    %s173 = sld [smem:[#allocation3 + $0x1a]]
    %v174 = vstv %s171
    %v175 = vsub.f32 %v47, %v174
    %v176 = vstv %s172
    %v177 = vsub.f32 %v49, %v176
    %v178 = vstv %s173
    %v179 = vsub.f32 %v51, %v178
    %v180 = vmul.f32 %v175, %v175
    %v181 = vmul.f32 %v177, %v177
    %v182 = vadd.f32 %v180, %v181
    %v183 = vmul.f32 %v179, %v179
    %v184 = vadd.f32 %v182, %v183
    %v185 = vmin.f32 %v170, %v184
    %s186 = sld [smem:[#allocation3 + $0x1b]]
    %s187 = sld [smem:[#allocation3 + $0x1c]]
    %s188 = sld [smem:[#allocation3 + $0x1d]]
    %v189 = vstv %s186
    %v190 = vsub.f32 %v47, %v189
    %v191 = vstv %s187
    %v192 = vsub.f32 %v49, %v191
    %v193 = vstv %s188
    %v194 = vsub.f32 %v51, %v193
    %v195 = vmul.f32 %v190, %v190
    %v196 = vmul.f32 %v192, %v192
    %v197 = vadd.f32 %v195, %v196
    %v198 = vmul.f32 %v194, %v194
    %v199 = vadd.f32 %v197, %v198
    %v200 = vmin.f32 %v185, %v199
    %s201 = sld [smem:[#allocation3 + $0x1e]]
    %s202 = sld [smem:[#allocation3 + $0x1f]]
    %s203 = sld [smem:[#allocation3 + $0x20]]
    %v204 = vstv %s201
    %v205 = vsub.f32 %v47, %v204
    %v206 = vstv %s202
    %v207 = vsub.f32 %v49, %v206
    %v208 = vstv %s203
    %v209 = vsub.f32 %v51, %v208
    %v210 = vmul.f32 %v205, %v205
    %v211 = vmul.f32 %v207, %v207
    %v212 = vadd.f32 %v210, %v211
    %v213 = vmul.f32 %v209, %v209
    %v214 = vadd.f32 %v212, %v213
    %v215 = vmin.f32 %v200, %v214
    %s216 = sld [smem:[#allocation3 + $0x21]]
    %s217 = sld [smem:[#allocation3 + $0x22]]
    %s218 = sld [smem:[#allocation3 + $0x23]]
    %v219 = vstv %s216
    %v220 = vsub.f32 %v47, %v219
    %v221 = vstv %s217
    %v222 = vsub.f32 %v49, %v221
    %v223 = vstv %s218
    %v224 = vsub.f32 %v51, %v223
    %v225 = vmul.f32 %v220, %v220
    %v226 = vmul.f32 %v222, %v222
    %v227 = vadd.f32 %v225, %v226
    %v228 = vmul.f32 %v224, %v224
    %v229 = vadd.f32 %v227, %v228
    %v230 = vmin.f32 %v215, %v229
    %v231 = vadd.f32 %v230, 1e-06
    %v232 = vrsqrt.pop %v231
    %v233 = vmul.f32 %v232, %v231
    %v234 = vmul.f32 %v233, %v232
    %v235 = vmul.f32 0.5, %v234
    %v236 = vsub.f32 1.5, %v235
    %v237 = vmul.f32 %v232, %v236
    %v238 = vmul.f32 %v231, %v237
    %vm239 = vcmp.eq.f32.partialorder %v231, inf
    %v240 = vsel %vm239, %v231, %v238
    %vm241 = vcmp.eq.f32.partialorder %v231, 0.0
    %v242 = vand.u32 %v231, 2147483648
    %v243 = vsel %vm241, %v242, %v240
    %v244 = vlaneseq
    %v245 = vshrl.u32 %v244, 7
    %v246 = vlaneseq
    %v247 = vand.u32 %v246, 127
    %s248 = smul.u32 0, 1024
    %v249 = vmul.u32 %v245, 128
    %v250 = vstv %s248
    %v251 = vadd.s32 %v250, %v249
    %v252 = vadd.s32 %v251, %v247
    %vm253 = vcmp.lt.s32.totalorder %v252, 256
    %v254 = vsel %vm253, %v243, 0.0
    %s255 = sld [smem:[#allocation2]]
    %256 = vadd.xlane.f32.xlu0 %v254
    %v257 = vpop.xlane.xlu0 %256
    %v258 = vrot.slane %v257, 4
    %v259 = vadd.f32 %v257, %v258
    %v260 = vrot.slane %v259, 2
    %v261 = vadd.f32 %v259, %v260
    %v262 = vrot.slane %v261, 1
    %v263 = vadd.f32 %v261, %v262
    %s264 = vtos %v263
    %s265 = sadd.f32 %s255, %s264
    %s266 = scalar_lea.smem [#allocation2], 0
    %267 = sst [smem:[%s266]] %s265
    // Predicated region
    $region22: #{tpu_custom_call.1} parent=1 // pred_check
      %p268 = pneg %p41
    $region23: #{tpu_custom_call.1} parent=1 // pred_check_branch
      %270 = sbr.rel (%p268) target = $region25
    $region24: #{tpu_custom_call.1} parent=1 // pred_region
      %s271 = sld [smem:[#allocation2]]
      %s272 = smul.f32 %s271, 0.0013020834
      %s273 = scalar_lea.smem [#allocation8], 0
      %274 = sst [smem:[%s273]] %s272
    $region25: #{tpu_custom_call.1} parent=1 // pred_fallthru
      _
    // Predicated region
    $region26: #{tpu_custom_call.1} parent=1 // pred_check
      _
    $region27: #{tpu_custom_call.1} parent=1 // pred_check_branch
      %276 = sbr.rel (0) target = $region29
    $region28: #{tpu_custom_call.1} parent=1 // pred_region
      %278 = vsyncadd [#allocation6], 0
      %s280 = sshll.u32 %s2, 4
      %s281 = int_to_ptr.hbm [resolvable:$true] %s280
      %283 = dma.smem_to_hbm [#allocation8], 16, %s281, [#allocation6]
    $region29: #{tpu_custom_call.1} parent=1 // pred_fallthru
      _
    // Predicated region
    $region30: #{tpu_custom_call.1} parent=1 // pred_check
      _
    $region31: #{tpu_custom_call.1} parent=1 // pred_check_branch
      %285 = sbr.rel (0) target = $region33
    $region32: #{tpu_custom_call.1} parent=1 // pred_region
      %287 = dma.done [#allocation6], 16
    $region33: #{tpu_custom_call.1} parent=1 // pred_fallthru
      _
    %288 = sfence
    %289 = vsyncpa [#allocation4], 1
    %290 = vsyncpa [#allocation5], 1
    %291 = vsyncpa [#allocation6], 1

</llo_original>
